<compile_context>
chip_gen: v6e
topology: v6e:2x2x1
jax: 0.10.0
libtpu: 0.0.40
codegen_flags: <defaults>
</compile_context>

<pallas_src>
import functools
import math

import jax
import jax.numpy as jnp
from jax.experimental import pallas as pl
from jax.experimental.pallas import tpu as pltpu

_LANES = 128
_MAX_FILTERS_PER_STEP = 64           # keeps the unrolled per-step loop small
_DEFAULT_ROWS_PER_STEP = 4096        # 4096 x 128 x 4B = 2 MiB output block


def _gabor_kernel(params_ref, x_ref, y_ref, out_ref, *, nb, sb, sig_hi):
    """Generate `nb` filters (sb lane-rows each) for grid step (i, t).

    params_ref: f32[7 * N_pad]    (SMEM) flat per-filter parameters.
    x_ref/y_ref: f32[sb, 128]     (VMEM) centered x / y coordinate slabs.
    out_ref:     f32[nb*sb, 128]  (VMEM) rows j*sb:(j+1)*sb = filter i*nb + j.
    """
    i = pl.program_id(0)
    x = x_ref[...]
    y = y_ref[...]

    for j in range(nb):                          # static unroll (nb <= 64)
        base = 7 * (i * nb + j)
        theta = jnp.clip(params_ref[base + 0], -jnp.pi, jnp.pi)
        sigma = jnp.clip(params_ref[base + 1], 3.0, sig_hi)
        lam = params_ref[base + 2]
        psi = params_ref[base + 3]
        gamma = params_ref[base + 4]
        cx = params_ref[base + 5]
        cy = params_ref[base + 6]

        # Per-filter scalar folding (once per filter, not per element).
        ct = jnp.cos(theta)
        st = jnp.sin(theta)
        sigma_y = sigma / gamma
        a = -0.5 / (sigma * sigma)
        b = -0.5 / (sigma_y * sigma_y)
        k = 2.0 * jnp.pi / lam
        tx = -(cx * ct + cy * st)                # fold center into the rotation
        ty = cx * st - cy * ct

        # Per-element hot path: mul/add + one exp + one cos.
        u = x * ct + y * st + tx                 # x_theta
        v = y * ct - x * st + ty                 # y_theta
        env = jnp.exp(a * (u * u) + b * (v * v))
        car = jnp.cos(k * u + psi)
        out_ref[pl.ds(j * sb, sb), :] = env * car


def _choose_tiling(n, s_raw, rows_per_step):
    """Pick (nb, sb, nt): out block = (nb*sb, 128), per-filter rows s_pad = sb*nt,
    grid = (n_pad//nb, nt).  Block sublane counts are multiples of 8 (or full)."""
    if n == 1:
        if s_raw > rows_per_step or s_raw >= 64:
            # Row-tile the single filter; >= 2 blocks so both v7x cores run.
            nt = max(2, math.ceil(s_raw / rows_per_step))
            sb = 8 * math.ceil(math.ceil(s_raw / nt) / 8)
        else:
            nt, sb = 1, s_raw
        return 1, sb, nt

    if s_raw > rows_per_step:
        # Large filters: one filter per step, row-tiled.
        nt = math.ceil(s_raw / rows_per_step)
        sb = 8 * math.ceil(math.ceil(s_raw / nt) / 8)
        return 1, sb, nt

    # Small / medium filters: batch several filters per grid step.
    nt = 1
    if s_raw >= 64:
        sb = 8 * math.ceil(s_raw / 8)        # pad per-filter rows to mult of 8
        m = 1
    else:
        sb = s_raw
        m = 8 // math.gcd(s_raw, 8)          # nb*sb must be a multiple of 8
    nb = min(n, _MAX_FILTERS_PER_STEP, max(1, rows_per_step // sb))
    if nb >= n:
        nb = (n + 1) // 2                    # >= 2 grid points along N (megacore)
    nb = max(m, m * math.ceil(nb / m))
    return nb, sb, nt


@functools.partial(jax.jit, static_argnums=(1, 2, 3))
def _gabor_bank_impl(params, H, W, rows_per_step):
    n = params.shape[0]
    p_total = H * W
    s_raw = math.ceil(p_total / _LANES)
    nb, sb, nt = _choose_tiling(n, s_raw, rows_per_step)
    s_pad = sb * nt
    n_pad = nb * math.ceil(n / nb)

    # Flat 1-D params in SMEM; pad the bank by repeating the last filter so
    # every block (and every SMEM read) is fully in-bounds.
    if n_pad > n:
        pad = jnp.broadcast_to(params[n - 1:n], (n_pad - n, 7))
        params = jnp.concatenate([params, pad], axis=0)
    flat_params = params.reshape(-1)

    # Centered coordinate slabs, flattened row-major, zero-padded to s_pad*128.
    total = s_pad * _LANES
    idx = jnp.arange(total, dtype=jnp.int32)
    valid = idx < p_total
    col = (idx % W).astype(jnp.float32)
    row = (idx // W).astype(jnp.float32)
    xs = jnp.where(valid, col - (W - 1) / 2.0, 0.0).reshape(s_pad, _LANES)
    ys = jnp.where(valid, row - (H - 1) / 2.0, 0.0).reshape(s_pad, _LANES)

    out_flat = pl.pallas_call(
        functools.partial(_gabor_kernel, nb=nb, sb=sb, sig_hi=min(H, W) / 2.0),
        out_shape=jax.ShapeDtypeStruct((n_pad * s_pad, _LANES), jnp.float32),
        grid=(n_pad // nb, nt),
        in_specs=[
            pl.BlockSpec(memory_space=pltpu.SMEM),               # params (flat)
            pl.BlockSpec((sb, _LANES), lambda i, t: (t, 0)),     # x slab
            pl.BlockSpec((sb, _LANES), lambda i, t: (t, 0)),     # y slab
        ],
        out_specs=pl.BlockSpec((nb * sb, _LANES), lambda i, t: (i * nt + t, 0)),
        compiler_params=pltpu.CompilerParams(
            dimension_semantics=("parallel", "parallel"),
            vmem_limit_bytes=32 * 1024 * 1024),
    )(flat_params, xs, ys)

    out = out_flat.reshape(n_pad, s_pad * _LANES)[:n, :p_total]
    return out.reshape(n, 1, H, W)


def gabor_bank(params, image_size, *, rows_per_step=_DEFAULT_ROWS_PER_STEP):
    """Generate a bank of Gabor filters.

    params: f32[N, 7] (or f32[7]) = [theta, sigma, Lambda, psi, gamma, cx, cy].
    Returns f32[N, 1, H, W].
    """
    H, W = image_size
    params = jnp.asarray(params, jnp.float32).reshape(-1, 7)
    return _gabor_bank_impl(params, int(H), int(W), int(rows_per_step))


def gabor_forward(params, image_size):
    """Single-filter forward matching GaborGenerator.forward(): f32[7] -> f32[1,1,H,W]."""
    return gabor_bank(jnp.reshape(params, (1, 7)), image_size)


def init_params(key):
    """Deterministic init mirroring GaborGenerator.__init__ shapes/ranges."""
    k_theta, k_sigma, k_lambda, k_psi = jax.random.split(key, 4)
    theta = jax.random.uniform(k_theta, ())                      # rand(1)
    sigma = jax.random.uniform(k_sigma, ()) + 3.0                # rand(1) + 3.0
    Lambda = jax.random.uniform(k_lambda, ()) + 9.5              # rand(1) + 9.5
    psi = jax.random.uniform(k_psi, ()) * (math.pi / 2.0)        # rand(1) * pi/2
    gamma = jnp.float32(1.0)                                     # zeros(1) + 1.0
    cx = jnp.float32(0.0)                                        # center[0]
    cy = jnp.float32(0.0)                                        # center[1]
    return jnp.stack([theta, sigma, Lambda, psi, gamma, cx, cy]).astype(jnp.float32)


def gabor_reference(params, image_size):
    """Pure-JAX reference (mirrors the PyTorch gen_gabor)."""
    H, W = image_size
    theta = jnp.clip(params[0], -jnp.pi, jnp.pi)
    sigma = jnp.clip(params[1], 3.0, min(H, W) / 2.0)
    Lambda, psi, gamma, cx, cy = params[2], params[3], params[4], params[5], params[6]
    sigma_x, sigma_y = sigma, sigma / gamma
    ys = jnp.arange(H, dtype=jnp.float32) - (H - 1) / 2.0
    xs = jnp.arange(W, dtype=jnp.float32) - (W - 1) / 2.0
    y, x = jnp.meshgrid(ys, xs, indexing="ij")
    x_theta = (x - cx) * jnp.cos(theta) + (y - cy) * jnp.sin(theta)
    y_theta = -(x - cx) * jnp.sin(theta) + (y - cy) * jnp.cos(theta)
    gb = jnp.exp(-0.5 * (x_theta**2 / sigma_x**2 + y_theta**2 / sigma_y**2)) * jnp.cos(
        2.0 * jnp.pi / Lambda * x_theta + psi
    )
    return gb.reshape(1, 1, H, W)


if __name__ == "__main__":
    key = jax.random.PRNGKey(0)

    # 1) Single small filter (the module's forward()), lane-dense packed layout.
    p1 = init_params(key)
    out1 = jax.block_until_ready(gabor_forward(p1, (16, 16)))
    ref1 = gabor_reference(p1, (16, 16))
    assert out1.shape == (1, 1, 16, 16)
    assert jnp.allclose(out1, ref1, atol=2e-5, rtol=1e-5)

    # 2) Bank of N=20 filters: one pallas_call, NB filters batched per grid step.
    N = 20
    keys = jax.random.split(key, N)
    pbank = jnp.stack([init_params(k) for k in keys])
    outb = jax.block_until_ready(gabor_bank(pbank, (16, 16)))
    refb = jnp.concatenate([gabor_reference(pbank[i], (16, 16)) for i in range(N)], axis=0)
    assert outb.shape == (N, 1, 16, 16)
    assert jnp.allclose(outb, refb, atol=2e-5, rtol=1e-5)

    # 3) Non power-of-two W + non-zero center (exercises the folded offsets).
    p2 = p1.at[5].set(1.5).at[6].set(-2.0)
    out2 = jax.block_until_ready(gabor_forward(p2, (24, 20)))
    ref2 = gabor_reference(p2, (24, 20))
    assert out2.shape == (1, 1, 24, 20)
    assert jnp.allclose(out2, ref2, atol=1e-4, rtol=1e-5)

    # 4) Row-tiled path with row padding (forced tiny row budget -> grid (1, 2)).
    out3 = jax.block_until_ready(
        gabor_bank(jnp.reshape(p1, (1, 7)), (40, 20), rows_per_step=4))
    ref3 = gabor_reference(p1, (40, 20))
    assert out3.shape == (1, 1, 40, 20)
    assert jnp.allclose(out3, ref3, atol=2e-5, rtol=1e-5)

    # 5) Larger single filter: automatically split into two row blocks (megacore).
    out4 = jax.block_until_ready(gabor_forward(p1, (96, 96)))
    ref4 = gabor_reference(p1, (96, 96))
    assert out4.shape == (1, 1, 96, 96)
    assert jnp.allclose(out4, ref4, atol=2e-5, rtol=1e-5)

    print("KERNEL_OK")
</pallas_src>

<mosaic_0001>
module attributes {stable_mosaic.version = 11 : i64} {
  func.func @_gabor_kernel(%arg0: i32, %arg1: i32, %arg2: memref<7xf32, #tpu.memory_space<smem>>, %arg3: memref<2x128xf32, #tpu.memory_space<vmem>>, %arg4: memref<2x128xf32, #tpu.memory_space<vmem>>, %arg5: memref<2x128xf32, #tpu.memory_space<vmem>>) attributes {dimension_semantics = [#tpu.dimension_semantics<parallel>, #tpu.dimension_semantics<parallel>], iteration_bounds = array<i64: 1, 1>, scalar_prefetch = 0 : i64, scratch_operands = 0 : i64, tpu.core_type = #tpu.core_type<tc>, window_params = [{transform_indices = @transform_0, window_bounds = array<i64: 7>}, {transform_indices = @transform_1, window_bounds = array<i64: 2, 128>}, {transform_indices = @transform_2, window_bounds = array<i64: 2, 128>}, {transform_indices = @transform_3, window_bounds = array<i64: 2, 128>}]} {
    %c0 = arith.constant 0 : index
    %c0_0 = arith.constant 0 : index
    %0 = vector.load %arg3[%c0, %c0_0] : memref<2x128xf32, #tpu.memory_space<vmem>>, vector<2x128xf32>
    %c0_1 = arith.constant 0 : index
    %c0_2 = arith.constant 0 : index
    %1 = vector.load %arg4[%c0_1, %c0_2] : memref<2x128xf32, #tpu.memory_space<vmem>>, vector<2x128xf32>
    %c1_i32 = arith.constant 1 : i32
    %2 = arith.muli %arg0, %c1_i32 : i32
    %c0_i32 = arith.constant 0 : i32
    %3 = arith.addi %2, %c0_i32 : i32
    %c7_i32 = arith.constant 7 : i32
    %4 = arith.muli %c7_i32, %3 : i32
    %c0_i32_3 = arith.constant 0 : i32
    %5 = arith.addi %4, %c0_i32_3 : i32
    %6 = arith.index_cast %5 : i32 to index
    %7 = memref.load %arg2[%6] : memref<7xf32, #tpu.memory_space<smem>>
    %cst = arith.constant -3.14159274 : f32
    %cst_4 = arith.constant 3.14159274 : f32
    %8 = arith.maximumf %cst, %7 : f32
    %9 = arith.minimumf %cst_4, %8 : f32
    %c1_i32_5 = arith.constant 1 : i32
    %10 = arith.addi %4, %c1_i32_5 : i32
    %11 = arith.index_cast %10 : i32 to index
    %12 = memref.load %arg2[%11] : memref<7xf32, #tpu.memory_space<smem>>
    %cst_6 = arith.constant 3.000000e+00 : f32
    %cst_7 = arith.constant 8.000000e+00 : f32
    %13 = arith.maximumf %cst_6, %12 : f32
    %14 = arith.minimumf %cst_7, %13 : f32
    %c2_i32 = arith.constant 2 : i32
    %15 = arith.addi %4, %c2_i32 : i32
    %16 = arith.index_cast %15 : i32 to index
    %17 = memref.load %arg2[%16] : memref<7xf32, #tpu.memory_space<smem>>
    %c3_i32 = arith.constant 3 : i32
    %18 = arith.addi %4, %c3_i32 : i32
    %19 = arith.index_cast %18 : i32 to index
    %20 = memref.load %arg2[%19] : memref<7xf32, #tpu.memory_space<smem>>
    %c4_i32 = arith.constant 4 : i32
    %21 = arith.addi %4, %c4_i32 : i32
    %22 = arith.index_cast %21 : i32 to index
    %23 = memref.load %arg2[%22] : memref<7xf32, #tpu.memory_space<smem>>
    %c5_i32 = arith.constant 5 : i32
    %24 = arith.addi %4, %c5_i32 : i32
    %25 = arith.index_cast %24 : i32 to index
    %26 = memref.load %arg2[%25] : memref<7xf32, #tpu.memory_space<smem>>
    %c6_i32 = arith.constant 6 : i32
    %27 = arith.addi %4, %c6_i32 : i32
    %28 = arith.index_cast %27 : i32 to index
    %29 = memref.load %arg2[%28] : memref<7xf32, #tpu.memory_space<smem>>
    %30 = math.cos %9 : f32
    %31 = math.sin %9 : f32
    %32 = arith.divf %14, %23 : f32
    %33 = arith.mulf %14, %14 : f32
    %cst_8 = arith.constant -5.000000e-01 : f32
    %34 = arith.divf %cst_8, %33 : f32
    %35 = arith.mulf %32, %32 : f32
    %cst_9 = arith.constant -5.000000e-01 : f32
    %36 = arith.divf %cst_9, %35 : f32
    %cst_10 = arith.constant 6.28318548 : f32
    %37 = arith.divf %cst_10, %17 : f32
    %38 = arith.mulf %26, %30 : f32
    %39 = arith.mulf %29, %31 : f32
    %40 = arith.addf %38, %39 : f32
    %cst_11 = arith.constant 0.000000e+00 : f32
    %41 = arith.subf %cst_11, %40 : f32
    %42 = arith.mulf %26, %31 : f32
    %43 = arith.mulf %29, %30 : f32
    %44 = arith.subf %42, %43 : f32
    %45 = vector.broadcast %30 : f32 to vector<2x128xf32>
    %46 = arith.mulf %0, %45 : vector<2x128xf32>
    %47 = vector.broadcast %31 : f32 to vector<2x128xf32>
    %48 = arith.mulf %1, %47 : vector<2x128xf32>
    %49 = arith.addf %46, %48 : vector<2x128xf32>
    %50 = vector.broadcast %41 : f32 to vector<2x128xf32>
    %51 = arith.addf %49, %50 : vector<2x128xf32>
    %52 = vector.broadcast %30 : f32 to vector<2x128xf32>
    %53 = arith.mulf %1, %52 : vector<2x128xf32>
    %54 = vector.broadcast %31 : f32 to vector<2x128xf32>
    %55 = arith.mulf %0, %54 : vector<2x128xf32>
    %56 = arith.subf %53, %55 : vector<2x128xf32>
    %57 = vector.broadcast %44 : f32 to vector<2x128xf32>
    %58 = arith.addf %56, %57 : vector<2x128xf32>
    %59 = arith.mulf %51, %51 : vector<2x128xf32>
    %60 = vector.broadcast %34 : f32 to vector<2x128xf32>
    %61 = arith.mulf %60, %59 : vector<2x128xf32>
    %62 = arith.mulf %58, %58 : vector<2x128xf32>
    %63 = vector.broadcast %36 : f32 to vector<2x128xf32>
    %64 = arith.mulf %63, %62 : vector<2x128xf32>
    %65 = arith.addf %61, %64 : vector<2x128xf32>
    %66 = math.exp %65 : vector<2x128xf32>
    %67 = vector.broadcast %37 : f32 to vector<2x128xf32>
    %68 = arith.mulf %67, %51 : vector<2x128xf32>
    %69 = vector.broadcast %20 : f32 to vector<2x128xf32>
    %70 = arith.addf %68, %69 : vector<2x128xf32>
    %71 = math.cos %70 : vector<2x128xf32>
    %72 = arith.mulf %66, %71 : vector<2x128xf32>
    %c0_12 = arith.constant 0 : index
    %c0_13 = arith.constant 0 : index
    %73 = vector.load %arg5[%c0_12, %c0_13] : memref<2x128xf32, #tpu.memory_space<vmem>>, vector<2x128xf32>
    tpu.vector_store %arg5[%c0_12, %c0_13], %72 {strides = array<i32>} : memref<2x128xf32, #tpu.memory_space<vmem>>, vector<2x128xf32>,
    return
  }
  func.func @transform_0(%arg0: i32, %arg1: i32) -> i32 {
    %c0_i32 = arith.constant 0 : i32
    %c0_i32_0 = arith.constant 0 : i32
    return %c0_i32 : i32
  }
  func.func @transform_1(%arg0: i32, %arg1: i32) -> (i32, i32) {
    %c0_i32 = arith.constant 0 : i32
    %c0_i32_0 = arith.constant 0 : i32
    return %arg1, %c0_i32 : i32, i32
  }
  func.func @transform_2(%arg0: i32, %arg1: i32) -> (i32, i32) {
    %c0_i32 = arith.constant 0 : i32
    %c0_i32_0 = arith.constant 0 : i32
    return %arg1, %c0_i32 : i32, i32
  }
  func.func @transform_3(%arg0: i32, %arg1: i32) -> (i32, i32) {
    %c1_i32 = arith.constant 1 : i32
    %0 = arith.muli %arg0, %c1_i32 : i32
    %1 = arith.addi %0, %arg1 : i32
    %c0_i32 = arith.constant 0 : i32
    %c0_i32_0 = arith.constant 0 : i32
    return %1, %c0_i32 : i32, i32
  }
}

</mosaic_0001>

<llo_original>
// kernel: _gabor_bank_impl.1
$region0: #{_gabor_bank_impl.1}
  #allocation0 [shape = 'u32[]', space=smem, size = 0x4, offset = 0x4, fixed_abs, tag = 'smem constant byte address 0x4 - core index']
  #allocation1 [shape = 'u32[144,128]{1,0:T(1,128)}', space=vmem, size = 0x12000, scoped, tag = 'internal scratch']
  %s0 = inlined_call_operand.vmem [shape: f32[7], index: 0, kind: input, shape index: {}]
  %s1 = inlined_call_operand.vmem [shape: f32[2,128], index: 1, kind: input, shape index: {}]
  %s2 = inlined_call_operand.vmem [shape: f32[2,128], index: 2, kind: input, shape index: {}]
  %s3 = inlined_call_operand.vmem [shape: f32[2,128], index: 3, kind: output, shape index: {}]
  %s4 = sld [smem:[#allocation0]]
  $region26: #{_gabor_bank_impl.1} parent=0
    _
  %s6 = ssub.s32 1, %s4
  %s7 = scalar_select 0, %s6, %s4
  $region1: #{_gabor_bank_impl.1} parent=0
    #allocation2 [shape = 'u8[512]{0}', space=smem, size = 0x200, scoped, tag = 'input window, operand 0, single buffered']
    #allocation3 [shape = 's32[1]{0}', space=sflag, size = 0x4, scoped, tag = 'scoped memory for _gabor_bank_impl.1']
    %8 = vsyncpa [#allocation3], 0
    // Predicated region
    $region2: #{_gabor_bank_impl.1} parent=1 // pred_check
      _
    $region3: #{_gabor_bank_impl.1} parent=1 // pred_check_branch
      %10 = sbr.rel (0) target = $region5
    $region4: #{_gabor_bank_impl.1} parent=1 // pred_region
      %s12 = ssub.s32 16, 16
      %13 = vsyncadd [#allocation3], %s12
      %s15 = sshll.u32 %s0, 4
      %s16 = int_to_ptr.vmem [resolvable:$true] %s15
      %18 = dma.vmem_to_smem %s16, 16, [#allocation2], [#allocation3]
    $region5: #{_gabor_bank_impl.1} parent=1 // pred_fallthru
      _
    // Predicated region
    $region6: #{_gabor_bank_impl.1} parent=1 // pred_check
      _
    $region7: #{_gabor_bank_impl.1} parent=1 // pred_check_branch
      %20 = sbr.rel (0) target = $region9
    $region8: #{_gabor_bank_impl.1} parent=1 // pred_region
      _
    $region9: #{_gabor_bank_impl.1} parent=1 // pred_fallthru
      _
    // Predicated region
    $region10: #{_gabor_bank_impl.1} parent=1 // pred_check
      _
    $region11: #{_gabor_bank_impl.1} parent=1 // pred_check_branch
      %22 = sbr.rel (0) target = $region13
    $region12: #{_gabor_bank_impl.1} parent=1 // pred_region
      _
    $region13: #{_gabor_bank_impl.1} parent=1 // pred_fallthru
      _
    // Predicated region
    $region14: #{_gabor_bank_impl.1} parent=1 // pred_check
      _
    $region15: #{_gabor_bank_impl.1} parent=1 // pred_check_branch
      %24 = sbr.rel (0) target = $region17
    $region16: #{_gabor_bank_impl.1} parent=1 // pred_region
      %25 = dma.done [#allocation3], 16
    $region17: #{_gabor_bank_impl.1} parent=1 // pred_fallthru
      _
    %26 = sfence
    %s27 = sadd.s32 0, 0
    %p28 = scmp.lt.s32.totalorder %s27, 0
    %s29 = scalar_select %p28, %s27, 0
    %s30 = smul.addr %s29, 2
    %s31 = scalar_lea.vmem %s3, %s30
    %s32 = sadd.s32 0, 0
    %p33 = scmp.lt.s32.totalorder %s32, 0
    %s34 = scalar_select %p33, %s32, 0
    %s35 = smul.addr %s34, 2
    %s36 = scalar_lea.vmem %s3, %s35
    %s37 = sadd.s32 0, 0
    %v38 = vld [vmem:[%s1] sm:$0x3]
    %v39 = vld [vmem:[%s2] sm:$0x3]
    %s40 = smul.u32 0, 7
    %s41 = sld [smem:[#allocation2 + %s40]]
    %s42 = smax.f32 %s41, -3.1415927
    %s43 = smin.f32 %s42, 3.1415927
    %s44 = sadd.s32 %s40, 1
    %s45 = sld [smem:[#allocation2 + %s44]]
    %s46 = smax.f32 %s45, 3.0
    %s47 = smin.f32 %s46, 8.0
    %s48 = sadd.s32 %s40, 2
    %s49 = sld [smem:[#allocation2 + %s48]]
    %s50 = sadd.s32 %s40, 3
    %s51 = sld [smem:[#allocation2 + %s50]]
    %s52 = sadd.s32 %s40, 4
    %s53 = sld [smem:[#allocation2 + %s52]]
    %s54 = sadd.s32 %s40, 5
    %s55 = sld [smem:[#allocation2 + %s54]]
    %s56 = sadd.s32 %s40, 6
    %s57 = sld [smem:[#allocation2 + %s56]]
    %v58 = vstv %s43
    %v59 = vand.u32 2147483647, %v58
    %vm60 = vcmp.le.f32.partialorder %v59, 0.7853982
    %vm61 = vcmp.lt.s32.totalorder %v58, 0
    %v62 = vand.u32 %v58, 2139095040
    %v63 = vshrl.u32 %v62, 23
    %v64 = vsub.s32 %v63, 127
    %v65 = vand.u32 2147483647, %v58
    %v66 = vand.u32 %v65, 8388607
    %v67 = vor.u32 %v66, 8388608
    %v68 = vsub.s32 0, %v67
    %v69 = vadd.s32 %v64, 1
    %vm70 = vcmp.gt.s32.totalorder %v69, 0
    %v71 = vsel %vm70, %v69, 0
    %v72 = vshrl.u32 %v71, 5
    %v73 = vand.u32 %v71, 31
    %v74 = vsub.s32 32, %v73
    %v75 = vshrl.u32 683565275, %v74
    %v76 = vshll.u32 683565275, %v73
    %v77 = vshrl.u32 2475754826, %v74
    %v78 = vor.u32 %v76, %v77
    %v79 = vshll.u32 2475754826, %v73
    %v80 = vshrl.u32 2131351028, %v74
    %v81 = vor.u32 %v79, %v80
    %v82 = vshll.u32 2131351028, %v73
    %v83 = vshrl.u32 2102212464, %v74
    %v84 = vor.u32 %v82, %v83
    %v85 = vshll.u32 2102212464, %v73
    %v86 = vshrl.u32 920167782, %v74
    %v87 = vor.u32 %v85, %v86
    %v88 = vshll.u32 920167782, %v73
    %v89 = vshrl.u32 1326507024, %v74
    %v90 = vor.u32 %v88, %v89
    %vm91 = vcmp.lt.s32.totalorder %v72, 1
    %vm92 = vcmp.lt.s32.totalorder %v72, 2
    %vm93 = vcmp.lt.s32.totalorder %v72, 3
    %vm94 = vcmp.lt.s32.totalorder %v72, 4
    %v95 = vsel %vm91, %v75, %v78
    %v96 = vsel %vm94, %v84, 2102212464
    %v97 = vsel %vm93, %v81, %v96
    %v98 = vsel %vm92, %v95, %v97
    %v99 = vsel %vm91, %v78, %v81
    %v100 = vsel %vm94, %v87, 920167782
    %v101 = vsel %vm93, %v84, %v100
    %v102 = vsel %vm92, %v99, %v101
    %v103 = vsel %vm91, %v81, %v84
    %v104 = vsel %vm94, %v90, 1326507024
    %v105 = vsel %vm93, %v87, %v104
    %v106 = vsel %vm92, %v103, %v105
    %v107 = vshll.u32 %v67, 8
    %v108 = vmul.u32.u64.compose %v107, %v106
    %v109 = vextract.low.u32 %v108
    %v110 = vextract.high.u32 %v108
    %v111 = vmul.u32.u64.compose %v107, %v102
    %v112 = vextract.low.u32 %v111
    %v113 = vextract.high.u32 %v111
    %v114 = vmul.u32 %v107, %v98
    %v115 = vadd.s32 %v110, %v112
    %vm116 = vc.u32 %v110, %v112
    %v117 = vadd.s32 %v113, 1
    %v118 = vsel %vm116, %v117, %v113
    %v119 = vadd.s32 %v114, %v118
    %v120 = vadd.s32 %v119, 536870912
    %v121 = vshrl.u32 %v120, 30
    %v122 = vshll.u32 %v121, 30
    %v123 = vsub.s32 %v119, %v122
    %vm124 = vcmp.lt.s32.totalorder %v123, 0
    %v125 = vsub.s32 0, %v123
    %v126 = vsel %vm124, %v125, %v123
    %v127 = vclz %v126
    %v128 = vsub.s32 %v127, 2
    %vm129 = vcmp.gt.s32.totalorder 0, %v128
    %v130 = vsel %vm129, 0, %v128
    %v131 = vsub.s32 32, %v130
    %v132 = vshll.u32 %v123, %v130
    %v133 = vshrl.u32 %v115, %v131
    %v134 = vor.u32 %v132, %v133
    %v135 = vsub.s32 4294967266, %v130
    %v136 = vadd.s32 %v135, 127
    %v137 = vshll.u32 %v136, 23
    %v138 = vor.u32 4788187, %v137
    %v139 = vand.u32 2147483647, %v138
    %v141 = vcvt.s32.f32 %v134
    %v142 = vmul.f32 %v141, %v139
    %v143 = vxor.u32 %v142, 2147483648
    %v144 = vsel %vm61, %v143, %v142
    %v145 = vsub.s32 4, %v121
    %v146 = vsel %vm61, %v145, %v121
    %v147 = vsel %vm60, %v58, %v144
    %v148 = vsel %vm60, 0, %v146
    %v149 = vcosq.f32.pop %v147
    %v150 = vsinq.f32.pop %v147
    %vm151 = vweird.f32 %v58
    %v152 = vand.u32 %v148, 3
    %vm153 = vcmp.lt.s32.totalorder %v152, 2
    %vm154 = vcmp.eq.s32.totalorder %v152, 0
    %v155 = vxor.u32 %v150, 2147483648
    %v156 = vsel %vm154, %v149, %v155
    %vm157 = vcmp.eq.s32.totalorder %v152, 2
    %v158 = vxor.u32 %v149, 2147483648
    %v159 = vsel %vm157, %v158, %v150
    %v160 = vsel %vm153, %v156, %v159
    %v161 = vsel %vm151, nan, %v160
    %s162 = vtos %v161
    %v163 = vstv %s43
    %v164 = vand.u32 2147483647, %v163
    %vm165 = vcmp.le.f32.partialorder %v164, 0.7853982
    %vm166 = vcmp.lt.s32.totalorder %v163, 0
    %v167 = vand.u32 %v163, 2139095040
    %v168 = vshrl.u32 %v167, 23
    %v169 = vsub.s32 %v168, 127
    %v170 = vand.u32 2147483647, %v163
    %v171 = vand.u32 %v170, 8388607
    %v172 = vor.u32 %v171, 8388608
    %v173 = vsub.s32 0, %v172
    %v174 = vadd.s32 %v169, 1
    %vm175 = vcmp.gt.s32.totalorder %v174, 0
    %v176 = vsel %vm175, %v174, 0
    %v177 = vshrl.u32 %v176, 5
    %v178 = vand.u32 %v176, 31
    %v179 = vsub.s32 32, %v178
    %v180 = vshrl.u32 683565275, %v179
    %v181 = vshll.u32 683565275, %v178
    %v182 = vshrl.u32 2475754826, %v179
    %v183 = vor.u32 %v181, %v182
    %v184 = vshll.u32 2475754826, %v178
    %v185 = vshrl.u32 2131351028, %v179
    %v186 = vor.u32 %v184, %v185
    %v187 = vshll.u32 2131351028, %v178
    %v188 = vshrl.u32 2102212464, %v179
    %v189 = vor.u32 %v187, %v188
    %v190 = vshll.u32 2102212464, %v178
    %v191 = vshrl.u32 920167782, %v179
    %v192 = vor.u32 %v190, %v191
    %v193 = vshll.u32 920167782, %v178
    %v194 = vshrl.u32 1326507024, %v179
    %v195 = vor.u32 %v193, %v194
    %vm196 = vcmp.lt.s32.totalorder %v177, 1
    %vm197 = vcmp.lt.s32.totalorder %v177, 2
    %vm198 = vcmp.lt.s32.totalorder %v177, 3
    %vm199 = vcmp.lt.s32.totalorder %v177, 4
    %v200 = vsel %vm196, %v180, %v183
    %v201 = vsel %vm199, %v189, 2102212464
    %v202 = vsel %vm198, %v186, %v201
    %v203 = vsel %vm197, %v200, %v202
    %v204 = vsel %vm196, %v183, %v186
    %v205 = vsel %vm199, %v192, 920167782
    %v206 = vsel %vm198, %v189, %v205
    %v207 = vsel %vm197, %v204, %v206
    %v208 = vsel %vm196, %v186, %v189
    %v209 = vsel %vm199, %v195, 1326507024
    %v210 = vsel %vm198, %v192, %v209
    %v211 = vsel %vm197, %v208, %v210
    %v212 = vshll.u32 %v172, 8
    %v213 = vmul.u32.u64.compose %v212, %v211
    %v214 = vextract.low.u32 %v213
    %v215 = vextract.high.u32 %v213
    %v216 = vmul.u32.u64.compose %v212, %v207
    %v217 = vextract.low.u32 %v216
    %v218 = vextract.high.u32 %v216
    %v219 = vmul.u32 %v212, %v203
    %v220 = vadd.s32 %v215, %v217
    %vm221 = vc.u32 %v215, %v217
    %v222 = vadd.s32 %v218, 1
    %v223 = vsel %vm221, %v222, %v218
    %v224 = vadd.s32 %v219, %v223
    %v225 = vadd.s32 %v224, 536870912
    %v226 = vshrl.u32 %v225, 30
    %v227 = vshll.u32 %v226, 30
    %v228 = vsub.s32 %v224, %v227
    %vm229 = vcmp.lt.s32.totalorder %v228, 0
    %v230 = vsub.s32 0, %v228
    %v231 = vsel %vm229, %v230, %v228
    %v232 = vclz %v231
    %v233 = vsub.s32 %v232, 2
    %vm234 = vcmp.gt.s32.totalorder 0, %v233
    %v235 = vsel %vm234, 0, %v233
    %v236 = vsub.s32 32, %v235
    %v237 = vshll.u32 %v228, %v235
    %v238 = vshrl.u32 %v220, %v236
    %v239 = vor.u32 %v237, %v238
    %v240 = vsub.s32 4294967266, %v235
    %v241 = vadd.s32 %v240, 127
    %v242 = vshll.u32 %v241, 23
    %v243 = vor.u32 4788187, %v242
    %v244 = vand.u32 2147483647, %v243
    %v246 = vcvt.s32.f32 %v239
    %v247 = vmul.f32 %v246, %v244
    %v248 = vxor.u32 %v247, 2147483648
    %v249 = vsel %vm166, %v248, %v247
    %v250 = vsub.s32 4, %v226
    %v251 = vsel %vm166, %v250, %v226
    %v252 = vsel %vm165, %v163, %v249
    %v253 = vsel %vm165, 0, %v251
    %v254 = vcosq.f32.pop %v252
    %v255 = vsinq.f32.pop %v252
    %vm256 = vweird.f32 %v163
    %v257 = vadd.s32 %v253, 3
    %v258 = vand.u32 %v257, 3
    %vm259 = vcmp.lt.s32.totalorder %v258, 2
    %vm260 = vcmp.eq.s32.totalorder %v258, 0
    %v261 = vxor.u32 %v255, 2147483648
    %v262 = vsel %vm260, %v254, %v261
    %vm263 = vcmp.eq.s32.totalorder %v258, 2
    %v264 = vxor.u32 %v254, 2147483648
    %v265 = vsel %vm263, %v264, %v255
    %v266 = vsel %vm259, %v262, %v265
    %v267 = vsel %vm256, nan, %v266
    %s268 = vtos %v267
    %v269 = vstv %s53
    %v270 = vrcp.pop %v269
    %s271 = vtos %v270
    %s272 = smul.f32 %s47, %s271
    %s273 = smul.f32 %s47, %s47
    %v274 = vstv %s273
    %v275 = vrcp.pop %v274
    %s276 = vtos %v275
    %s277 = smul.f32 -0.5, %s276
    %s278 = smul.f32 %s272, %s272
    %v279 = vstv %s278
    %v280 = vrcp.pop %v279
    %s281 = vtos %v280
    %s282 = smul.f32 -0.5, %s281
    %v283 = vstv %s49
    %v284 = vrcp.pop %v283
    %s285 = vtos %v284
    %s286 = smul.f32 6.2831855, %s285
    %s287 = smul.f32 %s55, %s162
    %s288 = smul.f32 %s57, %s268
    %s289 = sadd.f32 %s287, %s288
    %s290 = ssub.f32 0.0, %s289
    %s291 = smul.f32 %s55, %s268
    %s292 = smul.f32 %s57, %s162
    %s293 = ssub.f32 %s291, %s292
    %v294 = vstv %s162
    %v295 = vmul.f32 %v38, %v294
    %v296 = vstv %s268
    %v297 = vmul.f32 %v39, %v296
    %v298 = vadd.f32 %v295, %v297
    %v299 = vstv %s290
    %v300 = vadd.f32 %v298, %v299
    %v301 = vmul.f32 %v39, %v294
    %v302 = vmul.f32 %v38, %v296
    %v303 = vsub.f32 %v301, %v302
    %v304 = vstv %s293
    %v305 = vadd.f32 %v303, %v304
    %v306 = vmul.f32 %v300, %v300
    %v307 = vstv %s277
    %v308 = vmul.f32 %v307, %v306
    %v309 = vmul.f32 %v305, %v305
    %v310 = vstv %s282
    %v311 = vmul.f32 %v310, %v309
    %v312 = vadd.f32 %v308, %v311
    %v313 = vmul.f32 %v312, 1.442695
    %v314 = vpow.pop %v313
    %v315 = vstv %s286
    %v316 = vmul.f32 %v315, %v300
    %v317 = vstv %s51
    %v318 = vadd.f32 %v316, %v317
    %v319 = vand.u32 2147483647, %v318
    %vm320 = vcmp.le.f32.partialorder %v319, 0.7853982
    %vm321 = vcmp.lt.s32.totalorder %v318, 0
    %v322 = vand.u32 %v318, 2139095040
    %v323 = vshrl.u32 %v322, 23
    %v324 = vsub.s32 %v323, 127
    %v325 = vand.u32 2147483647, %v318
    %v326 = vand.u32 %v325, 8388607
    %v327 = vor.u32 %v326, 8388608
    %v328 = vsub.s32 0, %v327
    %v329 = vadd.s32 %v324, 1
    %vm330 = vcmp.gt.s32.totalorder %v329, 0
    %v331 = vsel %vm330, %v329, 0
    %v332 = vshrl.u32 %v331, 5
    %v333 = vand.u32 %v331, 31
    %v334 = vsub.s32 32, %v333
    %v335 = vshrl.u32 683565275, %v334
    %v336 = vshll.u32 683565275, %v333
    %v337 = vshrl.u32 2475754826, %v334
    %v338 = vor.u32 %v336, %v337
    %v339 = vshll.u32 2475754826, %v333
    %v340 = vshrl.u32 2131351028, %v334
    %v341 = vor.u32 %v339, %v340
    %v342 = vshll.u32 2131351028, %v333
    %v343 = vshrl.u32 2102212464, %v334
    %v344 = vor.u32 %v342, %v343
    %v345 = vshll.u32 2102212464, %v333
    %v346 = vshrl.u32 920167782, %v334
    %v347 = vor.u32 %v345, %v346
    %v348 = vshll.u32 920167782, %v333
    %v349 = vshrl.u32 1326507024, %v334
    %v350 = vor.u32 %v348, %v349
    %vm351 = vcmp.lt.s32.totalorder %v332, 1
    %vm352 = vcmp.lt.s32.totalorder %v332, 2
    %vm353 = vcmp.lt.s32.totalorder %v332, 3
    %vm354 = vcmp.lt.s32.totalorder %v332, 4
    %v355 = vsel %vm351, %v335, %v338
    %v356 = vsel %vm354, %v344, 2102212464
    %v357 = vsel %vm353, %v341, %v356
    %v358 = vsel %vm352, %v355, %v357
    %v359 = vsel %vm351, %v338, %v341
    %v360 = vsel %vm354, %v347, 920167782
    %v361 = vsel %vm353, %v344, %v360
    %v362 = vsel %vm352, %v359, %v361
    %v363 = vsel %vm351, %v341, %v344
    %v364 = vsel %vm354, %v350, 1326507024
    %v365 = vsel %vm353, %v347, %v364
    %v366 = vsel %vm352, %v363, %v365
    %v367 = vshll.u32 %v327, 8
    %v368 = vmul.u32.u64.compose %v367, %v366
    %v369 = vextract.low.u32 %v368
    %v370 = vextract.high.u32 %v368
    %v371 = vmul.u32.u64.compose %v367, %v362
    %v372 = vextract.low.u32 %v371
    %v373 = vextract.high.u32 %v371
    %v374 = vmul.u32 %v367, %v358
    %v375 = vadd.s32 %v370, %v372
    %vm376 = vc.u32 %v370, %v372
    %v377 = vadd.s32 %v373, 1
    %v378 = vsel %vm376, %v377, %v373
    %v379 = vadd.s32 %v374, %v378
    %v380 = vadd.s32 %v379, 536870912
    %v381 = vshrl.u32 %v380, 30
    %v382 = vshll.u32 %v381, 30
    %v383 = vsub.s32 %v379, %v382
    %vm384 = vcmp.lt.s32.totalorder %v383, 0
    %v385 = vsub.s32 0, %v383
    %v386 = vsel %vm384, %v385, %v383
    %v387 = vclz %v386
    %v388 = vsub.s32 %v387, 2
    %vm389 = vcmp.gt.s32.totalorder 0, %v388
    %v390 = vsel %vm389, 0, %v388
    %v391 = vsub.s32 32, %v390
    %v392 = vshll.u32 %v383, %v390
    %v393 = vshrl.u32 %v375, %v391
    %v394 = vor.u32 %v392, %v393
    %v395 = vsub.s32 4294967266, %v390
    %v396 = vadd.s32 %v395, 127
    %v397 = vshll.u32 %v396, 23
    %v398 = vor.u32 4788187, %v397
    %v399 = vand.u32 2147483647, %v398
    %v401 = vcvt.s32.f32 %v394
    %v402 = vmul.f32 %v401, %v399
    %v403 = vxor.u32 %v402, 2147483648
    %v404 = vsel %vm321, %v403, %v402
    %v405 = vsub.s32 4, %v381
    %v406 = vsel %vm321, %v405, %v381
    %v407 = vsel %vm320, %v318, %v404
    %v408 = vsel %vm320, 0, %v406
    %v409 = vcosq.f32.pop %v407
    %v410 = vsinq.f32.pop %v407
    %vm411 = vweird.f32 %v318
    %v412 = vand.u32 %v408, 3
    %vm413 = vcmp.lt.s32.totalorder %v412, 2
    %vm414 = vcmp.eq.s32.totalorder %v412, 0
    %v415 = vxor.u32 %v410, 2147483648
    %v416 = vsel %vm414, %v409, %v415
    %vm417 = vcmp.eq.s32.totalorder %v412, 2
    %v418 = vxor.u32 %v409, 2147483648
    %v419 = vsel %vm417, %v418, %v410
    %v420 = vsel %vm413, %v416, %v419
    %v421 = vsel %vm411, nan, %v420
    %v422 = vmul.f32 %v314, %v421
    %423 = vst [vmem:[%s36] sm:$0x3] %v422
    %s424 = sadd.s32 0, 0
    %p425 = scmp.lt.s32.totalorder %s424, 0
    %s426 = scalar_select %p425, %s424, 0
    %s427 = smul.addr %s426, 2
    %s428 = scalar_lea.vmem %s3, %s427
    // Predicated region
    $region18: #{_gabor_bank_impl.1} parent=1 // pred_check
      _
    $region19: #{_gabor_bank_impl.1} parent=1 // pred_check_branch
      %430 = sbr.rel (0) target = $region21
    $region20: #{_gabor_bank_impl.1} parent=1 // pred_region
      %s431 = sadd.s32 0, 0
    $region21: #{_gabor_bank_impl.1} parent=1 // pred_fallthru
      _
    // Predicated region
    $region22: #{_gabor_bank_impl.1} parent=1 // pred_check
      _
    $region23: #{_gabor_bank_impl.1} parent=1 // pred_check_branch
      %433 = sbr.rel (0) target = $region25
    $region24: #{_gabor_bank_impl.1} parent=1 // pred_region
      %s434 = sadd.s32 0, 0
      %p435 = scmp.lt.s32.totalorder %s434, 0
      %s436 = scalar_select %p435, %s434, 0
      %s437 = smul.addr %s436, 2
      %s438 = scalar_lea.vmem %s3, %s437
    $region25: #{_gabor_bank_impl.1} parent=1 // pred_fallthru
      _
    %439 = vsyncpa [#allocation3], 1

</llo_original>
